<compile_context>
chip_gen: v7x
topology: tpu7x:2x2x1
jax: 0.10.0
libtpu: 0.0.40
codegen_flags: <defaults>
</compile_context>

<pallas_src>
import jax
import jax.numpy as jnp
from jax import lax
from jax.experimental import pallas as pl
from jax.experimental.pallas import tpu as pltpu


def _round_up(a, b):
    return ((a + b - 1) // b) * b


def _device_kind():
    try:
        return jax.devices()[0].device_kind.lower()
    except Exception:
        return ""


def _make_mse_kernel(rows, tm, lane, n_k, needs_mask):
    """Partial sum-of-squared-differences, accumulated in the resident output block.

    grid = (num_splits ["parallel"], n_k ["arbitrary"]).
    o_ref: (8, lane) f32 output block, constant along k -> stays resident in VMEM and
    acts as the accumulator (zeroed at k==0, written back once at the end).
    """

    def kernel(x_ref, t_ref, o_ref):
        k = pl.program_id(1)

        @pl.when(k == 0)
        def _init():
            o_ref[...] = jnp.zeros_like(o_ref)

        # Hot loop: pure VPU (sub, mul, add); upcast inside so bf16 inputs keep HBM
        # traffic halved while accumulation stays f32.
        d = x_ref[...].astype(jnp.float32) - t_ref[...].astype(jnp.float32)
        dd = d * d

        if needs_mask:
            # Only emitted when grid coverage != rows: zero out rows past the end of
            # the (unpadded) array.  Mask is derived from program ids, so clamped /
            # duplicated edge blocks contribute exactly zero.
            blk = pl.program_id(0) * n_k + k
            rid = blk * tm + lax.broadcasted_iota(jnp.int32, (tm, lane), 0)
            dd = jnp.where(rid < rows, dd, 0.0)

        # Fold row-groups of 8 into the (8, lane) accumulator: elementwise vreg adds.
        o_ref[...] += dd.reshape(tm // 8, 8, lane).sum(axis=0)

    return kernel


def content_loss(x, target, *, row_tile=None, num_splits=None, buffers=None,
                 min_kernel_elements=2 * 2048 * 512):
    """MSE(x, target) == torch.nn.functional.mse_loss(input, target) (mean reduction)."""
    assert x.shape == target.shape, "input/target shapes must match"
    assert x.dtype == target.dtype, "input/target dtypes must match"
    n_total = x.size
    if n_total == 0:
        return jnp.float32(0.0)

    itemsize = jnp.dtype(x.dtype).itemsize
    sub = max(8, 32 // max(itemsize, 1))  # dtype sublane pack: 8 f32, 16 bf16, 32 int8

    # Copy-free lane-dense 2D view: pick a 128-multiple lane width that divides n.
    lane = next((w for w in (512, 256, 128) if n_total % w == 0), None)
    rows = (n_total // lane) if lane else 0

    # Fast path: tiny inputs, or sizes with no copy-free lane-dense view -> fused XLA.
    if lane is None or rows < sub or n_total < min_kernel_elements:
        d = x.astype(jnp.float32) - target.astype(jnp.float32)
        return (jnp.sum(d * d) / jnp.float32(n_total)).astype(jnp.float32)

    kind = _device_kind()
    is_v7 = "v7" in kind
    is_v5e = ("v5 lite" in kind) or ("v5e" in kind)
    if num_splits is None:
        num_splits = 2 if is_v7 else 1      # = TensorCores per chip (megacore only on v7x)
    if buffers is None:
        buffers = 3 if is_v7 else 2         # deeper pipeline to hide step overhead @3.2TB/s
    if row_tile is None:
        row_tile = 1024 if is_v5e else 2048  # 2 / 4 MiB per input per step (f32)

    if rows < num_splits * 2 * sub:          # too few rows to split across cores
        num_splits = 1
    row_tile = max(sub, (row_tile // sub) * sub)

    per_split = -(-rows // num_splits)
    # tm: multiple of the dtype sublane pack, never larger than the array's row count.
    tm = min(row_tile, _round_up(per_split, sub), (rows // sub) * sub)
    n_k = -(-rows // (num_splits * tm))
    needs_mask = (num_splits * n_k * tm) != rows
    max_blk = (rows - 1) // tm

    # Free (bitcast) reshape of the contiguous operands -- no concatenate / padding copy.
    x2 = x.reshape(rows, lane)
    t2 = target.reshape(rows, lane)

    if needs_mask:
        in_map = lambda p, k: (jnp.minimum(p * n_k + k, max_blk), 0)
    else:
        in_map = lambda p, k: (p * n_k + k, 0)

    def in_spec():
        if buffers == 2:
            return pl.BlockSpec((tm, lane), in_map)
        return pl.BlockSpec((tm, lane), in_map, pipeline_mode=pl.Buffered(buffers))

    tile_bytes = tm * lane * itemsize
    # 2 inputs x `buffers` pipeline buffers x tile, plus generous margin for the output
    # block, semaphores and Mosaic internal scratch.  Explicit so v5e's 16 MiB default
    # scoped limit is not hit with the larger tiles.
    vmem_limit = int(2 * buffers * tile_bytes + (8 << 20))

    cost = pl.CostEstimate(
        flops=3 * n_total,
        transcendentals=0,
        bytes_accessed=2 * n_total * itemsize + num_splits * 8 * lane * 4,
    )

    partials = pl.pallas_call(
        _make_mse_kernel(rows, tm, lane, n_k, needs_mask),
        out_shape=jax.ShapeDtypeStruct((num_splits * 8, lane), jnp.float32),
        grid_spec=pltpu.PrefetchScalarGridSpec(
            num_scalar_prefetch=0,
            grid=(num_splits, n_k),
            in_specs=[in_spec(), in_spec()],
            # Each parallel split owns its own (8, lane) output block -> no races; on
            # v7x the two TensorCores work on disjoint row ranges.
            out_specs=pl.BlockSpec((8, lane), lambda p, k: (p, 0)),
        ),
        compiler_params=pltpu.CompilerParams(
            dimension_semantics=("parallel", "arbitrary"),
            vmem_limit_bytes=vmem_limit,
        ),
        cost_estimate=cost,
    )(x2, t2)

    # Tiny final reduction + mean (divide by the true element count) in plain JAX.
    return (jnp.sum(partials) / jnp.float32(n_total)).astype(jnp.float32)


class ContentLoss:
    """Mirror of the PyTorch module: stores the detached target, forward = MSE.

    Since the wrapper no longer pads/copies, the per-call reshape of `target` into the
    kernel's lane-dense layout is a free bitcast, so no explicit pre-packing is needed.
    """

    def __init__(self, target):
        self.target = lax.stop_gradient(target)  # == target.detach()

    def __call__(self, x, **kwargs):
        return content_loss(x, self.target, **kwargs)


if __name__ == "__main__":
    key = jax.random.PRNGKey(0)
    k_x, k_t = jax.random.split(key)

    # Small NCHW conv-feature block (divisible by 128 -> Pallas path, no masking).
    shape = (2, 8, 16, 64)  # 16384 elements
    x = jax.random.normal(k_x, shape, dtype=jnp.float32)
    target = jax.random.normal(k_t, shape, dtype=jnp.float32)

    loss_mod = ContentLoss(target)
    # Force the Pallas kernel even at this small size (default would take the XLA fast path).
    loss = loss_mod(x, min_kernel_elements=0)
    jax.block_until_ready(loss)

    ref = jnp.mean((x - target) ** 2)
    assert jnp.allclose(loss, ref, rtol=1e-5, atol=1e-6), (loss, ref)

    # Also exercise the masked / multi-step path: rows (75) not divisible by the tile.
    shape2 = (2, 5, 24, 40)  # 9600 elements -> lane=128, rows=75, partial last block
    x2 = jax.random.normal(k_x, shape2, dtype=jnp.float32)
    t2 = jax.random.normal(k_t, shape2, dtype=jnp.float32)
    loss2 = content_loss(x2, t2, min_kernel_elements=0, row_tile=16)
    jax.block_until_ready(loss2)
    ref2 = jnp.mean((x2 - t2) ** 2)
    assert jnp.allclose(loss2, ref2, rtol=1e-5, atol=1e-6), (loss2, ref2)

    # Default path on a tiny input takes the plain-XLA fast path (also correct).
    loss3 = loss_mod(x)
    assert jnp.allclose(loss3, ref, rtol=1e-5, atol=1e-6), (loss3, ref)

    print("KERNEL_OK")
</pallas_src>

<mosaic_0001>
module attributes {stable_mosaic.version = 11 : i64} {
  func.func @kernel(%arg0: i32, %arg1: i32, %arg2: memref<32x512xf32, #tpu.memory_space<vmem>>, %arg3: memref<32x512xf32, #tpu.memory_space<vmem>>, %arg4: memref<8x512xf32, #tpu.memory_space<vmem>>) attributes {dimension_semantics = [#tpu.dimension_semantics<parallel>, #tpu.dimension_semantics<arbitrary>], iteration_bounds = array<i64: 1, 1>, scalar_prefetch = 0 : i64, scratch_operands = 0 : i64, tpu.core_type = #tpu.core_type<tc>, window_params = [{transform_indices = @transform_0, window_bounds = array<i64: 32, 512>}, {transform_indices = @transform_1, window_bounds = array<i64: 32, 512>}, {transform_indices = @transform_2, window_bounds = array<i64: 8, 512>}]} {
    %c0_i32 = arith.constant 0 : i32
    %0 = arith.cmpi eq, %arg1, %c0_i32 : i32
    %1 = arith.extui %0 : i1 to i32
    %c0_i32_0 = arith.constant 0 : i32
    %2 = arith.cmpi ne, %1, %c0_i32_0 : i32
    scf.if %2 {
      %cst_8 = arith.constant 0.000000e+00 : f32
      %12 = vector.broadcast %cst_8 : f32 to vector<8x512xf32>
      %c0_9 = arith.constant 0 : index
      %c0_10 = arith.constant 0 : index
      %13 = vector.load %arg4[%c0_9, %c0_10] : memref<8x512xf32, #tpu.memory_space<vmem>>, vector<8x512xf32>
      tpu.vector_store %arg4[%c0_9, %c0_10], %12 {strides = array<i32>} : memref<8x512xf32, #tpu.memory_space<vmem>>, vector<8x512xf32>,
    } else {
    }
    %c0 = arith.constant 0 : index
    %c0_1 = arith.constant 0 : index
    %3 = vector.load %arg2[%c0, %c0_1] : memref<32x512xf32, #tpu.memory_space<vmem>>, vector<32x512xf32>
    %c0_2 = arith.constant 0 : index
    %c0_3 = arith.constant 0 : index
    %4 = vector.load %arg3[%c0_2, %c0_3] : memref<32x512xf32, #tpu.memory_space<vmem>>, vector<32x512xf32>
    %5 = arith.subf %3, %4 : vector<32x512xf32>
    %6 = arith.mulf %5, %5 : vector<32x512xf32>
    %c0_4 = arith.constant 0 : index
    %c0_5 = arith.constant 0 : index
    %7 = vector.load %arg4[%c0_4, %c0_5] : memref<8x512xf32, #tpu.memory_space<vmem>>, vector<8x512xf32>
    %8 = vector.shape_cast %6 : vector<32x512xf32> to vector<4x8x512xf32>
    %cst = arith.constant dense<0.000000e+00> : vector<8x512xf32>
    %9 = vector.multi_reduction <add>, %8, %cst [0] : vector<4x8x512xf32> to vector<8x512xf32>
    %10 = arith.addf %7, %9 : vector<8x512xf32>
    %c0_6 = arith.constant 0 : index
    %c0_7 = arith.constant 0 : index
    %11 = vector.load %arg4[%c0_6, %c0_7] : memref<8x512xf32, #tpu.memory_space<vmem>>, vector<8x512xf32>
    tpu.vector_store %arg4[%c0_6, %c0_7], %10 {strides = array<i32>} : memref<8x512xf32, #tpu.memory_space<vmem>>, vector<8x512xf32>,
    return
  }
  func.func @transform_0(%arg0: i32, %arg1: i32) -> (i32, i32) {
    %c1_i32 = arith.constant 1 : i32
    %0 = arith.muli %arg0, %c1_i32 : i32
    %1 = arith.addi %0, %arg1 : i32
    %c0_i32 = arith.constant 0 : i32
    %c0_i32_0 = arith.constant 0 : i32
    return %1, %c0_i32 : i32, i32
  }
  func.func @transform_1(%arg0: i32, %arg1: i32) -> (i32, i32) {
    %c1_i32 = arith.constant 1 : i32
    %0 = arith.muli %arg0, %c1_i32 : i32
    %1 = arith.addi %0, %arg1 : i32
    %c0_i32 = arith.constant 0 : i32
    %c0_i32_0 = arith.constant 0 : i32
    return %1, %c0_i32 : i32, i32
  }
  func.func @transform_2(%arg0: i32, %arg1: i32) -> (i32, i32) {
    %c0_i32 = arith.constant 0 : i32
    %c0_i32_0 = arith.constant 0 : i32
    return %arg0, %c0_i32 : i32, i32
  }
}

</mosaic_0001>

<llo_original>
// kernel: tpu_custom_call.1
$region0: #{tpu_custom_call.1}
  #allocation0 [shape = 'u32[]', space=smem, size = 0x4, offset = 0x4, fixed_abs, tag = 'smem constant byte address 0x4 - core index']
  #allocation1 [shape = 'u32[144,128]{1,0:T(1,128)}', space=vmem, size = 0x12000, scoped, tag = 'internal scratch']
  %s0 = inlined_call_operand.hbm [shape: f32[32,512], index: 0, kind: input, shape index: {}]
  %s1 = inlined_call_operand.hbm [shape: f32[32,512], index: 1, kind: input, shape index: {}]
  %s2 = inlined_call_operand.hbm [shape: f32[8,512], index: 2, kind: output, shape index: {}]
  %s3 = sld [smem:[#allocation0]]
  $region30: #{tpu_custom_call.1} parent=0
    _
  %s5 = ssub.s32 1, %s3
  %s6 = scalar_select 0, %s5, %s3
  $region1: #{tpu_custom_call.1} parent=0
    #allocation2 [shape = 'u8[65536]{0}', space=vmem, size = 0x10000, scoped, tag = 'input window, operand 0, single buffered']
    #allocation3 [shape = 's32[1]{0}', space=sflag, size = 0x4, scoped, tag = 'scoped memory for tpu_custom_call.1']
    #allocation4 [shape = 's32[1]{0}', space=sflag, size = 0x4, scoped, tag = 'scoped memory for tpu_custom_call.1']
    #allocation5 [shape = 'u8[65536]{0}', space=vmem, size = 0x10000, scoped, tag = 'input window, operand 1, single buffered']
    #allocation6 [shape = 's32[1]{0}', space=sflag, size = 0x4, scoped, tag = 'scoped memory for tpu_custom_call.1']
    #allocation7 [shape = 'u8[16384]{0}', space=vmem, size = 0x4000, scoped, tag = 'output window, operand 0, single buffered']
    %7 = vsyncpa [#allocation3], 0
    %8 = vsyncpa [#allocation6], 0
    %9 = vsyncpa [#allocation4], 0
    // Predicated region
    $region2: #{tpu_custom_call.1} parent=1 // pred_check
      _
    $region3: #{tpu_custom_call.1} parent=1 // pred_check_branch
      %11 = sbr.rel (0) target = $region5
    $region4: #{tpu_custom_call.1} parent=1 // pred_region
      %s12 = sadd.s32 0, 0
      %s13 = smul.u32 4, %s12
      %s15 = ssub.s32 2048, 2048
      %16 = vsyncadd [#allocation3], %s15
      %s17 = smul.addr %s13, 4
      %s18 = smul.addr %s17, 128
      %s19 = scalar_lea.hbm %s0, %s18
      %s20 = sshll.u32 [#allocation2], 4
      %s21 = int_to_ptr.vmem [resolvable:$true] %s20
      %26 = dma.hbm_to_vmem [thread:$0]  %s19, 2048, %s21, [#allocation3], 512, 512, 32
    $region5: #{tpu_custom_call.1} parent=1 // pred_fallthru
      _
    // Predicated region
    $region6: #{tpu_custom_call.1} parent=1 // pred_check
      _
    $region7: #{tpu_custom_call.1} parent=1 // pred_check_branch
      %28 = sbr.rel (0) target = $region9
    $region8: #{tpu_custom_call.1} parent=1 // pred_region
      %s29 = sadd.s32 0, 0
      %s30 = smul.u32 4, %s29
      %s32 = ssub.s32 2048, 2048
      %33 = vsyncadd [#allocation6], %s32
      %s34 = smul.addr %s30, 4
      %s35 = smul.addr %s34, 128
      %s36 = scalar_lea.hbm %s1, %s35
      %s37 = sshll.u32 [#allocation5], 4
      %s38 = int_to_ptr.vmem [resolvable:$true] %s37
      %43 = dma.hbm_to_vmem [thread:$0]  %s36, 2048, %s38, [#allocation6], 512, 512, 32
    $region9: #{tpu_custom_call.1} parent=1 // pred_fallthru
      _
    // Predicated region
    $region10: #{tpu_custom_call.1} parent=1 // pred_check
      _
    $region11: #{tpu_custom_call.1} parent=1 // pred_check_branch
      %45 = sbr.rel (0) target = $region13
    $region12: #{tpu_custom_call.1} parent=1 // pred_region
      %46 = dma.done [#allocation3], 2048
    $region13: #{tpu_custom_call.1} parent=1 // pred_fallthru
      _
    // Predicated region
    $region14: #{tpu_custom_call.1} parent=1 // pred_check
      _
    $region15: #{tpu_custom_call.1} parent=1 // pred_check_branch
      %48 = sbr.rel (0) target = $region17
    $region16: #{tpu_custom_call.1} parent=1 // pred_region
      %49 = dma.done [#allocation6], 2048
    $region17: #{tpu_custom_call.1} parent=1 // pred_fallthru
      _
    %s50 = sadd.s32 0, 0
    %s51 = smul.u32 4, %s50
    %s52 = sadd.s32 0, 0
    %s53 = smul.u32 4, %s52
    %p54 = scmp.eq.s32.totalorder 0, 0
    // Predicated region
    $region18: #{tpu_custom_call.1} parent=1 // pred_check
      %p55 = pneg %p54
    $region19: #{tpu_custom_call.1} parent=1 // pred_check_branch
      %57 = sbr.rel (%p55) target = $region21
    $region20: #{tpu_custom_call.1} parent=1 // pred_region
      %58 = vst [vmem:[#allocation7] sm:$0xff] 0.0
      %59 = vst [vmem:[#allocation7 + $0x8] sm:$0xff] 0.0
      %60 = vst [vmem:[#allocation7 + $0x10] sm:$0xff] 0.0
      %61 = vst [vmem:[#allocation7 + $0x18] sm:$0xff] 0.0
    $region21: #{tpu_custom_call.1} parent=1 // pred_fallthru
      _
    %v62 = vld [vmem:[#allocation2] sm:$0xff]
    %v63 = vld [vmem:[#allocation2 + $0x8] sm:$0xff]
    %v64 = vld [vmem:[#allocation2 + $0x10] sm:$0xff]
    %v65 = vld [vmem:[#allocation2 + $0x18] sm:$0xff]
    %v66 = vld [vmem:[#allocation2 + $0x20] sm:$0xff]
    %v67 = vld [vmem:[#allocation2 + $0x28] sm:$0xff]
    %v68 = vld [vmem:[#allocation2 + $0x30] sm:$0xff]
    %v69 = vld [vmem:[#allocation2 + $0x38] sm:$0xff]
    %v70 = vld [vmem:[#allocation2 + $0x40] sm:$0xff]
    %v71 = vld [vmem:[#allocation2 + $0x48] sm:$0xff]
    %v72 = vld [vmem:[#allocation2 + $0x50] sm:$0xff]
    %v73 = vld [vmem:[#allocation2 + $0x58] sm:$0xff]
    %v74 = vld [vmem:[#allocation2 + $0x60] sm:$0xff]
    %v75 = vld [vmem:[#allocation2 + $0x68] sm:$0xff]
    %v76 = vld [vmem:[#allocation2 + $0x70] sm:$0xff]
    %v77 = vld [vmem:[#allocation2 + $0x78] sm:$0xff]
    %v78 = vld [vmem:[#allocation5] sm:$0xff]
    %v79 = vld [vmem:[#allocation5 + $0x8] sm:$0xff]
    %v80 = vld [vmem:[#allocation5 + $0x10] sm:$0xff]
    %v81 = vld [vmem:[#allocation5 + $0x18] sm:$0xff]
    %v82 = vld [vmem:[#allocation5 + $0x20] sm:$0xff]
    %v83 = vld [vmem:[#allocation5 + $0x28] sm:$0xff]
    %v84 = vld [vmem:[#allocation5 + $0x30] sm:$0xff]
    %v85 = vld [vmem:[#allocation5 + $0x38] sm:$0xff]
    %v86 = vld [vmem:[#allocation5 + $0x40] sm:$0xff]
    %v87 = vld [vmem:[#allocation5 + $0x48] sm:$0xff]
    %v88 = vld [vmem:[#allocation5 + $0x50] sm:$0xff]
    %v89 = vld [vmem:[#allocation5 + $0x58] sm:$0xff]
    %v90 = vld [vmem:[#allocation5 + $0x60] sm:$0xff]
    %v91 = vld [vmem:[#allocation5 + $0x68] sm:$0xff]
    %v92 = vld [vmem:[#allocation5 + $0x70] sm:$0xff]
    %v93 = vld [vmem:[#allocation5 + $0x78] sm:$0xff]
    %v94 = vsub.f32 %v62, %v78
    %v95 = vsub.f32 %v63, %v79
    %v96 = vsub.f32 %v64, %v80
    %v97 = vsub.f32 %v65, %v81
    %v98 = vsub.f32 %v66, %v82
    %v99 = vsub.f32 %v67, %v83
    %v100 = vsub.f32 %v68, %v84
    %v101 = vsub.f32 %v69, %v85
    %v102 = vsub.f32 %v70, %v86
    %v103 = vsub.f32 %v71, %v87
    %v104 = vsub.f32 %v72, %v88
    %v105 = vsub.f32 %v73, %v89
    %v106 = vsub.f32 %v74, %v90
    %v107 = vsub.f32 %v75, %v91
    %v108 = vsub.f32 %v76, %v92
    %v109 = vsub.f32 %v77, %v93
    %v110 = vmul.f32 %v94, %v94
    %v111 = vmul.f32 %v95, %v95
    %v112 = vmul.f32 %v96, %v96
    %v113 = vmul.f32 %v97, %v97
    %v114 = vmul.f32 %v98, %v98
    %v115 = vmul.f32 %v99, %v99
    %v116 = vmul.f32 %v100, %v100
    %v117 = vmul.f32 %v101, %v101
    %v118 = vmul.f32 %v102, %v102
    %v119 = vmul.f32 %v103, %v103
    %v120 = vmul.f32 %v104, %v104
    %v121 = vmul.f32 %v105, %v105
    %v122 = vmul.f32 %v106, %v106
    %v123 = vmul.f32 %v107, %v107
    %v124 = vmul.f32 %v108, %v108
    %v125 = vmul.f32 %v109, %v109
    %v126 = vld [vmem:[#allocation7] sm:$0xff]
    %v127 = vld [vmem:[#allocation7 + $0x8] sm:$0xff]
    %v128 = vld [vmem:[#allocation7 + $0x10] sm:$0xff]
    %v129 = vld [vmem:[#allocation7 + $0x18] sm:$0xff]
    %v130 = vadd.f32 %v110, %v114
    %v131 = vadd.f32 %v130, %v118
    %v132 = vadd.f32 %v131, %v122
    %v133 = vadd.f32 %v111, %v115
    %v134 = vadd.f32 %v133, %v119
    %v135 = vadd.f32 %v134, %v123
    %v136 = vadd.f32 %v112, %v116
    %v137 = vadd.f32 %v136, %v120
    %v138 = vadd.f32 %v137, %v124
    %v139 = vadd.f32 %v113, %v117
    %v140 = vadd.f32 %v139, %v121
    %v141 = vadd.f32 %v140, %v125
    %v142 = vadd.f32 %v126, %v132
    %v143 = vadd.f32 %v127, %v135
    %v144 = vadd.f32 %v128, %v138
    %v145 = vadd.f32 %v129, %v141
    %146 = vst [vmem:[#allocation7] sm:$0xff] %v142
    %147 = vst [vmem:[#allocation7 + $0x8] sm:$0xff] %v143
    %148 = vst [vmem:[#allocation7 + $0x10] sm:$0xff] %v144
    %149 = vst [vmem:[#allocation7 + $0x18] sm:$0xff] %v145
    // Predicated region
    $region22: #{tpu_custom_call.1} parent=1 // pred_check
      _
    $region23: #{tpu_custom_call.1} parent=1 // pred_check_branch
      %151 = sbr.rel (0) target = $region25
    $region24: #{tpu_custom_call.1} parent=1 // pred_region
      %s153 = ssub.s32 512, 512
      %154 = vsyncadd [#allocation4], %s153
      %s156 = sshll.u32 [#allocation7], 4
      %s157 = int_to_ptr.vmem [resolvable:$true] %s156
      %159 = dma.vmem_to_hbm [thread:$0]  %s157, 512, %s2, [#allocation4]
    $region25: #{tpu_custom_call.1} parent=1 // pred_fallthru
      _
    // Predicated region
    $region26: #{tpu_custom_call.1} parent=1 // pred_check
      _
    $region27: #{tpu_custom_call.1} parent=1 // pred_check_branch
      %161 = sbr.rel (0) target = $region29
    $region28: #{tpu_custom_call.1} parent=1 // pred_region
      %162 = dma.done [#allocation4], 512
    $region29: #{tpu_custom_call.1} parent=1 // pred_fallthru
      _
    %163 = vsyncpa [#allocation3], 1
    %164 = vsyncpa [#allocation6], 1
    %165 = vsyncpa [#allocation4], 1

</llo_original>
